<compile_context>
chip_gen: v7x
topology: tpu7x:2x2x1
jax: 0.10.0
libtpu: 0.0.40
codegen_flags: <defaults>
</compile_context>

<pallas_src>
import jax
import jax.numpy as jnp
from jax.experimental import pallas as pl
from jax.experimental.pallas import tpu as pltpu


def _exp_kernel(x_ref, o_ref):
    # Elementwise exp on the whole VMEM tile (EUP path); purely HBM-bound.
    o_ref[...] = jnp.exp(x_ref[...])


def _sublane_multiple(dtype):
    itemsize = jnp.dtype(dtype).itemsize
    return {4: 8, 2: 16, 1: 32}.get(itemsize, 8)


def _chip_config():
    """Returns (target_block_bytes, tensorcores_per_chip) for the attached TPU."""
    kind = ""
    try:
        kind = jax.devices()[0].device_kind.lower()
    except Exception:
        pass
    if "v7" in kind:
        # v7x: ~3.2 TB/s HBM per TC, so bigger blocks amortize the ~0.35us/step
        # overhead. 4 MiB blocks -> double-buffered in+out ~16 MiB, comfortably
        # under the 32 MiB scoped-VMEM default (64 MiB physical). 2 TCs/chip.
        return 4 * 1024 * 1024, 2
    if "v6" in kind:
        # v6e: 4 MiB blocks -> ~16 MiB live, well under the 32 MiB default.
        return 4 * 1024 * 1024, 1
    # v5e (16 MiB scoped-VMEM default) and unknown parts: stay at 2 MiB.
    return 2 * 1024 * 1024, 1


# Below this many bytes the pallas_call launch/pipeline overhead dominates and
# the opaque kernel boundary blocks XLA fusion; plain jnp.exp is strictly better.
_MIN_PALLAS_BYTES = 64 * 1024


def pallas_exp(x):
    """Elementwise exp via a Pallas TPU kernel (matches torch.exp)."""
    orig_shape = x.shape
    dtype = x.dtype
    n = x.size

    # torch.exp promotes integer inputs to float; jnp.exp does the same.  The
    # Pallas path is only used for floating dtypes.
    if n == 0 or not jnp.issubdtype(dtype, jnp.floating):
        return jnp.exp(x)

    itemsize = jnp.dtype(dtype).itemsize
    if n * itemsize < _MIN_PALLAS_BYTES:
        return jnp.exp(x)  # tiny-input bypass

    target_block_bytes, num_cores = _chip_config()
    sub = _sublane_multiple(dtype)

    # 1) Lane-dense 2D view with zero copies: widest lane dim (multiple of 128)
    #    that divides n.  Pallas masks a partial last row-block, so the row
    #    count need not be a sublane multiple.
    lanes = None
    for cand in (2048, 1024, 512, 256, 128):
        if n % cand == 0:
            lanes = cand
            break

    if lanes is not None:
        n_bulk, n_tail = n, 0
    else:
        # Ragged size: kernel on the largest 128-divisible prefix, tail (<128
        # elements) with jnp.exp.  No padded copy, no full-array output slice.
        lanes = 128
        n_bulk = (n // lanes) * lanes
        n_tail = n - n_bulk

    flat = x.reshape(-1)  # contiguous reshape: free
    rows = n_bulk // lanes
    x2d = (flat if n_tail == 0 else flat[:n_bulk]).reshape(rows, lanes)

    # 2) Block rows sized for ~target_block_bytes, clamped to the array so
    #    small inputs do no redundant work.
    row_bytes = lanes * itemsize
    block_rows = max(sub, (target_block_bytes // row_bytes) // sub * sub)
    block_rows = min(block_rows, rows)

    # 3) Megacore: only split a would-be single-block array on 2-TC parts
    #    (v7x).  On single-TC v5e/v6e this would just add a serial grid step.
    if (num_cores > 1 and block_rows == rows and rows >= 2 * sub
            and rows * row_bytes > (1 << 20)):
        block_rows = pl.cdiv(pl.cdiv(rows, num_cores), sub) * sub

    grid = (pl.cdiv(rows, block_rows),)

    out2d = pl.pallas_call(
        _exp_kernel,
        out_shape=jax.ShapeDtypeStruct((rows, lanes), dtype),
        grid=grid,
        in_specs=[pl.BlockSpec((block_rows, lanes), lambda i: (i, 0))],
        out_specs=pl.BlockSpec((block_rows, lanes), lambda i: (i, 0)),
        compiler_params=pltpu.CompilerParams(
            dimension_semantics=("parallel",)),
    )(x2d)

    if n_tail == 0:
        return out2d.reshape(orig_shape)
    tail = jnp.exp(flat[n_bulk:])
    return jnp.concatenate([out2d.reshape(-1), tail]).reshape(orig_shape)


if __name__ == "__main__":
    key = jax.random.PRNGKey(0)
    k1, k2, k3, k4 = jax.random.split(key, 4)

    # Small NCHW tensor matching the module's typical input (takes the
    # tiny-input bypass; semantics identical to torch.exp).
    x = jax.random.normal(k1, (2, 4, 16, 16), dtype=jnp.float32)
    y = jax.block_until_ready(pallas_exp(x))
    assert y.shape == x.shape and y.dtype == x.dtype
    assert jnp.allclose(y, jnp.exp(x), rtol=1e-6, atol=1e-6)

    # Larger tensor that exercises the Pallas kernel (zero-copy lane-dense path).
    x_big = jax.random.normal(k2, (4, 8, 64, 64), dtype=jnp.float32)  # 512 KiB
    y_big = jax.block_until_ready(pallas_exp(x_big))
    assert y_big.shape == x_big.shape and y_big.dtype == x_big.dtype
    assert jnp.allclose(y_big, jnp.exp(x_big), rtol=1e-6, atol=1e-6)

    # Ragged size (not divisible by 128): bulk-prefix kernel + jnp.exp tail.
    x_odd = jax.random.normal(k3, (257, 129), dtype=jnp.float32)
    y_odd = jax.block_until_ready(pallas_exp(x_odd))
    assert y_odd.shape == x_odd.shape
    assert jnp.allclose(y_odd, jnp.exp(x_odd), rtol=1e-6, atol=1e-6)

    # bf16 path (sublane multiple 16).
    x_bf16 = jax.random.normal(k4, (16, 32, 128), dtype=jnp.bfloat16)
    y_bf16 = jax.block_until_ready(pallas_exp(x_bf16))
    assert y_bf16.shape == x_bf16.shape and y_bf16.dtype == x_bf16.dtype
    assert jnp.allclose(y_bf16.astype(jnp.float32),
                        jnp.exp(x_bf16).astype(jnp.float32),
                        rtol=2e-2, atol=2e-2)

    print("KERNEL_OK")
</pallas_src>

<mosaic_0001>
module attributes {stable_mosaic.version = 11 : i64} {
  func.func @_exp_kernel(%arg0: i32, %arg1: memref<64x2048xf32, #tpu.memory_space<vmem>>, %arg2: memref<64x2048xf32, #tpu.memory_space<vmem>>) attributes {dimension_semantics = [#tpu.dimension_semantics<parallel>], iteration_bounds = array<i64: 1>, scalar_prefetch = 0 : i64, scratch_operands = 0 : i64, tpu.core_type = #tpu.core_type<tc>, window_params = [{transform_indices = @transform_0, window_bounds = array<i64: 64, 2048>}, {transform_indices = @transform_1, window_bounds = array<i64: 64, 2048>}]} {
    %c0 = arith.constant 0 : index
    %c0_0 = arith.constant 0 : index
    %0 = vector.load %arg1[%c0, %c0_0] : memref<64x2048xf32, #tpu.memory_space<vmem>>, vector<64x2048xf32>
    %1 = math.exp %0 : vector<64x2048xf32>
    %c0_1 = arith.constant 0 : index
    %c0_2 = arith.constant 0 : index
    %2 = vector.load %arg2[%c0_1, %c0_2] : memref<64x2048xf32, #tpu.memory_space<vmem>>, vector<64x2048xf32>
    tpu.vector_store %arg2[%c0_1, %c0_2], %1 {strides = array<i32>} : memref<64x2048xf32, #tpu.memory_space<vmem>>, vector<64x2048xf32>,
    return
  }
  func.func @transform_0(%arg0: i32) -> (i32, i32) {
    %c0_i32 = arith.constant 0 : i32
    %c0_i32_0 = arith.constant 0 : i32
    return %arg0, %c0_i32 : i32, i32
  }
  func.func @transform_1(%arg0: i32) -> (i32, i32) {
    %c0_i32 = arith.constant 0 : i32
    %c0_i32_0 = arith.constant 0 : i32
    return %arg0, %c0_i32 : i32, i32
  }
}

</mosaic_0001>

<llo_original>
// kernel: tpu_custom_call.1
$region0: #{tpu_custom_call.1}
  #allocation0 [shape = 'u32[]', space=smem, size = 0x4, offset = 0x4, fixed_abs, tag = 'smem constant byte address 0x4 - core index']
  #allocation1 [shape = 'u32[144,128]{1,0:T(1,128)}', space=vmem, size = 0x12000, scoped, tag = 'internal scratch']
  %s0 = inlined_call_operand.hbm [shape: f32[64,2048], index: 0, kind: input, shape index: {}]
  %s1 = inlined_call_operand.hbm [shape: f32[64,2048], index: 1, kind: output, shape index: {}]
  %s2 = sld [smem:[#allocation0]]
  $region18: #{tpu_custom_call.1} parent=0
    _
  %s4 = ssub.s32 1, %s2
  %s5 = scalar_select 0, %s4, %s2
  $region1: #{tpu_custom_call.1} parent=0
    #allocation2 [shape = 'u8[524288]{0}', space=vmem, size = 0x80000, scoped, tag = 'input window, operand 0, single buffered']
    #allocation3 [shape = 's32[1]{0}', space=sflag, size = 0x4, scoped, tag = 'scoped memory for tpu_custom_call.1']
    #allocation4 [shape = 's32[1]{0}', space=sflag, size = 0x4, scoped, tag = 'scoped memory for tpu_custom_call.1']
    #allocation5 [shape = 'u8[524288]{0}', space=vmem, size = 0x80000, scoped, tag = 'output window, operand 0, single buffered']
    %6 = vsyncpa [#allocation3], 0
    %7 = vsyncpa [#allocation4], 0
    // Predicated region
    $region2: #{tpu_custom_call.1} parent=1 // pred_check
      _
    $region3: #{tpu_custom_call.1} parent=1 // pred_check_branch
      %9 = sbr.rel (0) target = $region5
    $region4: #{tpu_custom_call.1} parent=1 // pred_region
      %s11 = ssub.s32 16384, 16384
      %12 = vsyncadd [#allocation3], %s11
      %s13 = sshll.u32 [#allocation2], 4
      %s14 = int_to_ptr.vmem [resolvable:$true] %s13
      %19 = dma.hbm_to_vmem [thread:$0]  %s0, 16384, %s14, [#allocation3], 2048, 2048, 128
    $region5: #{tpu_custom_call.1} parent=1 // pred_fallthru
      _
    // Predicated region
    $region6: #{tpu_custom_call.1} parent=1 // pred_check
      _
    $region7: #{tpu_custom_call.1} parent=1 // pred_check_branch
      %21 = sbr.rel (0) target = $region9
    $region8: #{tpu_custom_call.1} parent=1 // pred_region
      %22 = dma.done [#allocation3], 16384
    $region9: #{tpu_custom_call.1} parent=1 // pred_fallthru
      _
    %v23 = vld [vmem:[#allocation2] sm:$0xff]
    %v24 = vld [vmem:[#allocation2 + $0x8] sm:$0xff]
    %v25 = vld [vmem:[#allocation2 + $0x10] sm:$0xff]
    %v26 = vld [vmem:[#allocation2 + $0x18] sm:$0xff]
    %v27 = vld [vmem:[#allocation2 + $0x20] sm:$0xff]
    %v28 = vld [vmem:[#allocation2 + $0x28] sm:$0xff]
    %v29 = vld [vmem:[#allocation2 + $0x30] sm:$0xff]
    %v30 = vld [vmem:[#allocation2 + $0x38] sm:$0xff]
    %v31 = vld [vmem:[#allocation2 + $0x40] sm:$0xff]
    %v32 = vld [vmem:[#allocation2 + $0x48] sm:$0xff]
    %v33 = vld [vmem:[#allocation2 + $0x50] sm:$0xff]
    %v34 = vld [vmem:[#allocation2 + $0x58] sm:$0xff]
    %v35 = vld [vmem:[#allocation2 + $0x60] sm:$0xff]
    %v36 = vld [vmem:[#allocation2 + $0x68] sm:$0xff]
    %v37 = vld [vmem:[#allocation2 + $0x70] sm:$0xff]
    %v38 = vld [vmem:[#allocation2 + $0x78] sm:$0xff]
    %v39 = vld [vmem:[#allocation2 + $0x80] sm:$0xff]
    %v40 = vld [vmem:[#allocation2 + $0x88] sm:$0xff]
    %v41 = vld [vmem:[#allocation2 + $0x90] sm:$0xff]
    %v42 = vld [vmem:[#allocation2 + $0x98] sm:$0xff]
    %v43 = vld [vmem:[#allocation2 + $0xa0] sm:$0xff]
    %v44 = vld [vmem:[#allocation2 + $0xa8] sm:$0xff]
    %v45 = vld [vmem:[#allocation2 + $0xb0] sm:$0xff]
    %v46 = vld [vmem:[#allocation2 + $0xb8] sm:$0xff]
    %v47 = vld [vmem:[#allocation2 + $0xc0] sm:$0xff]
    %v48 = vld [vmem:[#allocation2 + $0xc8] sm:$0xff]
    %v49 = vld [vmem:[#allocation2 + $0xd0] sm:$0xff]
    %v50 = vld [vmem:[#allocation2 + $0xd8] sm:$0xff]
    %v51 = vld [vmem:[#allocation2 + $0xe0] sm:$0xff]
    %v52 = vld [vmem:[#allocation2 + $0xe8] sm:$0xff]
    %v53 = vld [vmem:[#allocation2 + $0xf0] sm:$0xff]
    %v54 = vld [vmem:[#allocation2 + $0xf8] sm:$0xff]
    %v55 = vld [vmem:[#allocation2 + $0x100] sm:$0xff]
    %v56 = vld [vmem:[#allocation2 + $0x108] sm:$0xff]
    %v57 = vld [vmem:[#allocation2 + $0x110] sm:$0xff]
    %v58 = vld [vmem:[#allocation2 + $0x118] sm:$0xff]
    %v59 = vld [vmem:[#allocation2 + $0x120] sm:$0xff]
    %v60 = vld [vmem:[#allocation2 + $0x128] sm:$0xff]
    %v61 = vld [vmem:[#allocation2 + $0x130] sm:$0xff]
    %v62 = vld [vmem:[#allocation2 + $0x138] sm:$0xff]
    %v63 = vld [vmem:[#allocation2 + $0x140] sm:$0xff]
    %v64 = vld [vmem:[#allocation2 + $0x148] sm:$0xff]
    %v65 = vld [vmem:[#allocation2 + $0x150] sm:$0xff]
    %v66 = vld [vmem:[#allocation2 + $0x158] sm:$0xff]
    %v67 = vld [vmem:[#allocation2 + $0x160] sm:$0xff]
    %v68 = vld [vmem:[#allocation2 + $0x168] sm:$0xff]
    %v69 = vld [vmem:[#allocation2 + $0x170] sm:$0xff]
    %v70 = vld [vmem:[#allocation2 + $0x178] sm:$0xff]
    %v71 = vld [vmem:[#allocation2 + $0x180] sm:$0xff]
    %v72 = vld [vmem:[#allocation2 + $0x188] sm:$0xff]
    %v73 = vld [vmem:[#allocation2 + $0x190] sm:$0xff]
    %v74 = vld [vmem:[#allocation2 + $0x198] sm:$0xff]
    %v75 = vld [vmem:[#allocation2 + $0x1a0] sm:$0xff]
    %v76 = vld [vmem:[#allocation2 + $0x1a8] sm:$0xff]
    %v77 = vld [vmem:[#allocation2 + $0x1b0] sm:$0xff]
    %v78 = vld [vmem:[#allocation2 + $0x1b8] sm:$0xff]
    %v79 = vld [vmem:[#allocation2 + $0x1c0] sm:$0xff]
    %v80 = vld [vmem:[#allocation2 + $0x1c8] sm:$0xff]
    %v81 = vld [vmem:[#allocation2 + $0x1d0] sm:$0xff]
    %v82 = vld [vmem:[#allocation2 + $0x1d8] sm:$0xff]
    %v83 = vld [vmem:[#allocation2 + $0x1e0] sm:$0xff]
    %v84 = vld [vmem:[#allocation2 + $0x1e8] sm:$0xff]
    %v85 = vld [vmem:[#allocation2 + $0x1f0] sm:$0xff]
    %v86 = vld [vmem:[#allocation2 + $0x1f8] sm:$0xff]
    %v87 = vld [vmem:[#allocation2 + $0x200] sm:$0xff]
    %v88 = vld [vmem:[#allocation2 + $0x208] sm:$0xff]
    %v89 = vld [vmem:[#allocation2 + $0x210] sm:$0xff]
    %v90 = vld [vmem:[#allocation2 + $0x218] sm:$0xff]
    %v91 = vld [vmem:[#allocation2 + $0x220] sm:$0xff]
    %v92 = vld [vmem:[#allocation2 + $0x228] sm:$0xff]
    %v93 = vld [vmem:[#allocation2 + $0x230] sm:$0xff]
    %v94 = vld [vmem:[#allocation2 + $0x238] sm:$0xff]
    %v95 = vld [vmem:[#allocation2 + $0x240] sm:$0xff]
    %v96 = vld [vmem:[#allocation2 + $0x248] sm:$0xff]
    %v97 = vld [vmem:[#allocation2 + $0x250] sm:$0xff]
    %v98 = vld [vmem:[#allocation2 + $0x258] sm:$0xff]
    %v99 = vld [vmem:[#allocation2 + $0x260] sm:$0xff]
    %v100 = vld [vmem:[#allocation2 + $0x268] sm:$0xff]
    %v101 = vld [vmem:[#allocation2 + $0x270] sm:$0xff]
    %v102 = vld [vmem:[#allocation2 + $0x278] sm:$0xff]
    %v103 = vld [vmem:[#allocation2 + $0x280] sm:$0xff]
    %v104 = vld [vmem:[#allocation2 + $0x288] sm:$0xff]
    %v105 = vld [vmem:[#allocation2 + $0x290] sm:$0xff]
    %v106 = vld [vmem:[#allocation2 + $0x298] sm:$0xff]
    %v107 = vld [vmem:[#allocation2 + $0x2a0] sm:$0xff]
    %v108 = vld [vmem:[#allocation2 + $0x2a8] sm:$0xff]
    %v109 = vld [vmem:[#allocation2 + $0x2b0] sm:$0xff]
    %v110 = vld [vmem:[#allocation2 + $0x2b8] sm:$0xff]
    %v111 = vld [vmem:[#allocation2 + $0x2c0] sm:$0xff]
    %v112 = vld [vmem:[#allocation2 + $0x2c8] sm:$0xff]
    %v113 = vld [vmem:[#allocation2 + $0x2d0] sm:$0xff]
    %v114 = vld [vmem:[#allocation2 + $0x2d8] sm:$0xff]
    %v115 = vld [vmem:[#allocation2 + $0x2e0] sm:$0xff]
    %v116 = vld [vmem:[#allocation2 + $0x2e8] sm:$0xff]
    %v117 = vld [vmem:[#allocation2 + $0x2f0] sm:$0xff]
    %v118 = vld [vmem:[#allocation2 + $0x2f8] sm:$0xff]
    %v119 = vld [vmem:[#allocation2 + $0x300] sm:$0xff]
    %v120 = vld [vmem:[#allocation2 + $0x308] sm:$0xff]
    %v121 = vld [vmem:[#allocation2 + $0x310] sm:$0xff]
    %v122 = vld [vmem:[#allocation2 + $0x318] sm:$0xff]
    %v123 = vld [vmem:[#allocation2 + $0x320] sm:$0xff]
    %v124 = vld [vmem:[#allocation2 + $0x328] sm:$0xff]
    %v125 = vld [vmem:[#allocation2 + $0x330] sm:$0xff]
    %v126 = vld [vmem:[#allocation2 + $0x338] sm:$0xff]
    %v127 = vld [vmem:[#allocation2 + $0x340] sm:$0xff]
    %v128 = vld [vmem:[#allocation2 + $0x348] sm:$0xff]
    %v129 = vld [vmem:[#allocation2 + $0x350] sm:$0xff]
    %v130 = vld [vmem:[#allocation2 + $0x358] sm:$0xff]
    %v131 = vld [vmem:[#allocation2 + $0x360] sm:$0xff]
    %v132 = vld [vmem:[#allocation2 + $0x368] sm:$0xff]
    %v133 = vld [vmem:[#allocation2 + $0x370] sm:$0xff]
    %v134 = vld [vmem:[#allocation2 + $0x378] sm:$0xff]
    %v135 = vld [vmem:[#allocation2 + $0x380] sm:$0xff]
    %v136 = vld [vmem:[#allocation2 + $0x388] sm:$0xff]
    %v137 = vld [vmem:[#allocation2 + $0x390] sm:$0xff]
    %v138 = vld [vmem:[#allocation2 + $0x398] sm:$0xff]
    %v139 = vld [vmem:[#allocation2 + $0x3a0] sm:$0xff]
    %v140 = vld [vmem:[#allocation2 + $0x3a8] sm:$0xff]
    %v141 = vld [vmem:[#allocation2 + $0x3b0] sm:$0xff]
    %v142 = vld [vmem:[#allocation2 + $0x3b8] sm:$0xff]
    %v143 = vld [vmem:[#allocation2 + $0x3c0] sm:$0xff]
    %v144 = vld [vmem:[#allocation2 + $0x3c8] sm:$0xff]
    %v145 = vld [vmem:[#allocation2 + $0x3d0] sm:$0xff]
    %v146 = vld [vmem:[#allocation2 + $0x3d8] sm:$0xff]
    %v147 = vld [vmem:[#allocation2 + $0x3e0] sm:$0xff]
    %v148 = vld [vmem:[#allocation2 + $0x3e8] sm:$0xff]
    %v149 = vld [vmem:[#allocation2 + $0x3f0] sm:$0xff]
    %v150 = vld [vmem:[#allocation2 + $0x3f8] sm:$0xff]
    %v151 = vmul.f32 %v23, 1.442695
    %v152 = vpow.pop %v151
    %v153 = vmul.f32 %v24, 1.442695
    %v154 = vpow.pop %v153
    %v155 = vmul.f32 %v25, 1.442695
    %v156 = vpow.pop %v155
    %v157 = vmul.f32 %v26, 1.442695
    %v158 = vpow.pop %v157
    %v159 = vmul.f32 %v27, 1.442695
    %v160 = vpow.pop %v159
    %v161 = vmul.f32 %v28, 1.442695
    %v162 = vpow.pop %v161
    %v163 = vmul.f32 %v29, 1.442695
    %v164 = vpow.pop %v163
    %v165 = vmul.f32 %v30, 1.442695
    %v166 = vpow.pop %v165
    %v167 = vmul.f32 %v31, 1.442695
    %v168 = vpow.pop %v167
    %v169 = vmul.f32 %v32, 1.442695
    %v170 = vpow.pop %v169
    %v171 = vmul.f32 %v33, 1.442695
    %v172 = vpow.pop %v171
    %v173 = vmul.f32 %v34, 1.442695
    %v174 = vpow.pop %v173
    %v175 = vmul.f32 %v35, 1.442695
    %v176 = vpow.pop %v175
    %v177 = vmul.f32 %v36, 1.442695
    %v178 = vpow.pop %v177
    %v179 = vmul.f32 %v37, 1.442695
    %v180 = vpow.pop %v179
    %v181 = vmul.f32 %v38, 1.442695
    %v182 = vpow.pop %v181
    %v183 = vmul.f32 %v39, 1.442695
    %v184 = vpow.pop %v183
    %v185 = vmul.f32 %v40, 1.442695
    %v186 = vpow.pop %v185
    %v187 = vmul.f32 %v41, 1.442695
    %v188 = vpow.pop %v187
    %v189 = vmul.f32 %v42, 1.442695
    %v190 = vpow.pop %v189
    %v191 = vmul.f32 %v43, 1.442695
    %v192 = vpow.pop %v191
    %v193 = vmul.f32 %v44, 1.442695
    %v194 = vpow.pop %v193
    %v195 = vmul.f32 %v45, 1.442695
    %v196 = vpow.pop %v195
    %v197 = vmul.f32 %v46, 1.442695
    %v198 = vpow.pop %v197
    %v199 = vmul.f32 %v47, 1.442695
    %v200 = vpow.pop %v199
    %v201 = vmul.f32 %v48, 1.442695
    %v202 = vpow.pop %v201
    %v203 = vmul.f32 %v49, 1.442695
    %v204 = vpow.pop %v203
    %v205 = vmul.f32 %v50, 1.442695
    %v206 = vpow.pop %v205
    %v207 = vmul.f32 %v51, 1.442695
    %v208 = vpow.pop %v207
    %v209 = vmul.f32 %v52, 1.442695
    %v210 = vpow.pop %v209
    %v211 = vmul.f32 %v53, 1.442695
    %v212 = vpow.pop %v211
    %v213 = vmul.f32 %v54, 1.442695
    %v214 = vpow.pop %v213
    %v215 = vmul.f32 %v55, 1.442695
    %v216 = vpow.pop %v215
    %v217 = vmul.f32 %v56, 1.442695
    %v218 = vpow.pop %v217
    %v219 = vmul.f32 %v57, 1.442695
    %v220 = vpow.pop %v219
    %v221 = vmul.f32 %v58, 1.442695
    %v222 = vpow.pop %v221
    %v223 = vmul.f32 %v59, 1.442695
    %v224 = vpow.pop %v223
    %v225 = vmul.f32 %v60, 1.442695
    %v226 = vpow.pop %v225
    %v227 = vmul.f32 %v61, 1.442695
    %v228 = vpow.pop %v227
    %v229 = vmul.f32 %v62, 1.442695
    %v230 = vpow.pop %v229
    %v231 = vmul.f32 %v63, 1.442695
    %v232 = vpow.pop %v231
    %v233 = vmul.f32 %v64, 1.442695
    %v234 = vpow.pop %v233
    %v235 = vmul.f32 %v65, 1.442695
    %v236 = vpow.pop %v235
    %v237 = vmul.f32 %v66, 1.442695
    %v238 = vpow.pop %v237
    %v239 = vmul.f32 %v67, 1.442695
    %v240 = vpow.pop %v239
    %v241 = vmul.f32 %v68, 1.442695
    %v242 = vpow.pop %v241
    %v243 = vmul.f32 %v69, 1.442695
    %v244 = vpow.pop %v243
    %v245 = vmul.f32 %v70, 1.442695
    %v246 = vpow.pop %v245
    %v247 = vmul.f32 %v71, 1.442695
    %v248 = vpow.pop %v247
    %v249 = vmul.f32 %v72, 1.442695
    %v250 = vpow.pop %v249
    %v251 = vmul.f32 %v73, 1.442695
    %v252 = vpow.pop %v251
    %v253 = vmul.f32 %v74, 1.442695
    %v254 = vpow.pop %v253
    %v255 = vmul.f32 %v75, 1.442695
    %v256 = vpow.pop %v255
    %v257 = vmul.f32 %v76, 1.442695
    %v258 = vpow.pop %v257
    %v259 = vmul.f32 %v77, 1.442695
    %v260 = vpow.pop %v259
    %v261 = vmul.f32 %v78, 1.442695
    %v262 = vpow.pop %v261
    %v263 = vmul.f32 %v79, 1.442695
    %v264 = vpow.pop %v263
    %v265 = vmul.f32 %v80, 1.442695
    %v266 = vpow.pop %v265
    %v267 = vmul.f32 %v81, 1.442695
    %v268 = vpow.pop %v267
    %v269 = vmul.f32 %v82, 1.442695
    %v270 = vpow.pop %v269
    %v271 = vmul.f32 %v83, 1.442695
    %v272 = vpow.pop %v271
    %v273 = vmul.f32 %v84, 1.442695
    %v274 = vpow.pop %v273
    %v275 = vmul.f32 %v85, 1.442695
    %v276 = vpow.pop %v275
    %v277 = vmul.f32 %v86, 1.442695
    %v278 = vpow.pop %v277
    %v279 = vmul.f32 %v87, 1.442695
    %v280 = vpow.pop %v279
    %v281 = vmul.f32 %v88, 1.442695
    %v282 = vpow.pop %v281
    %v283 = vmul.f32 %v89, 1.442695
    %v284 = vpow.pop %v283
    %v285 = vmul.f32 %v90, 1.442695
    %v286 = vpow.pop %v285
    %v287 = vmul.f32 %v91, 1.442695
    %v288 = vpow.pop %v287
    %v289 = vmul.f32 %v92, 1.442695
    %v290 = vpow.pop %v289
    %v291 = vmul.f32 %v93, 1.442695
    %v292 = vpow.pop %v291
    %v293 = vmul.f32 %v94, 1.442695
    %v294 = vpow.pop %v293
    %v295 = vmul.f32 %v95, 1.442695
    %v296 = vpow.pop %v295
    %v297 = vmul.f32 %v96, 1.442695
    %v298 = vpow.pop %v297
    %v299 = vmul.f32 %v97, 1.442695
    %v300 = vpow.pop %v299
    %v301 = vmul.f32 %v98, 1.442695
    %v302 = vpow.pop %v301
    %v303 = vmul.f32 %v99, 1.442695
    %v304 = vpow.pop %v303
    %v305 = vmul.f32 %v100, 1.442695
    %v306 = vpow.pop %v305
    %v307 = vmul.f32 %v101, 1.442695
    %v308 = vpow.pop %v307
    %v309 = vmul.f32 %v102, 1.442695
    %v310 = vpow.pop %v309
    %v311 = vmul.f32 %v103, 1.442695
    %v312 = vpow.pop %v311
    %v313 = vmul.f32 %v104, 1.442695
    %v314 = vpow.pop %v313
    %v315 = vmul.f32 %v105, 1.442695
    %v316 = vpow.pop %v315
    %v317 = vmul.f32 %v106, 1.442695
    %v318 = vpow.pop %v317
    %v319 = vmul.f32 %v107, 1.442695
    %v320 = vpow.pop %v319
    %v321 = vmul.f32 %v108, 1.442695
    %v322 = vpow.pop %v321
    %v323 = vmul.f32 %v109, 1.442695
    %v324 = vpow.pop %v323
    %v325 = vmul.f32 %v110, 1.442695
    %v326 = vpow.pop %v325
    %v327 = vmul.f32 %v111, 1.442695
    %v328 = vpow.pop %v327
    %v329 = vmul.f32 %v112, 1.442695
    %v330 = vpow.pop %v329
    %v331 = vmul.f32 %v113, 1.442695
    %v332 = vpow.pop %v331
    %v333 = vmul.f32 %v114, 1.442695
    %v334 = vpow.pop %v333
    %v335 = vmul.f32 %v115, 1.442695
    %v336 = vpow.pop %v335
    %v337 = vmul.f32 %v116, 1.442695
    %v338 = vpow.pop %v337
    %v339 = vmul.f32 %v117, 1.442695
    %v340 = vpow.pop %v339
    %v341 = vmul.f32 %v118, 1.442695
    %v342 = vpow.pop %v341
    %v343 = vmul.f32 %v119, 1.442695
    %v344 = vpow.pop %v343
    %v345 = vmul.f32 %v120, 1.442695
    %v346 = vpow.pop %v345
    %v347 = vmul.f32 %v121, 1.442695
    %v348 = vpow.pop %v347
    %v349 = vmul.f32 %v122, 1.442695
    %v350 = vpow.pop %v349
    %v351 = vmul.f32 %v123, 1.442695
    %v352 = vpow.pop %v351
    %v353 = vmul.f32 %v124, 1.442695
    %v354 = vpow.pop %v353
    %v355 = vmul.f32 %v125, 1.442695
    %v356 = vpow.pop %v355
    %v357 = vmul.f32 %v126, 1.442695
    %v358 = vpow.pop %v357
    %v359 = vmul.f32 %v127, 1.442695
    %v360 = vpow.pop %v359
    %v361 = vmul.f32 %v128, 1.442695
    %v362 = vpow.pop %v361
    %v363 = vmul.f32 %v129, 1.442695
    %v364 = vpow.pop %v363
    %v365 = vmul.f32 %v130, 1.442695
    %v366 = vpow.pop %v365
    %v367 = vmul.f32 %v131, 1.442695
    %v368 = vpow.pop %v367
    %v369 = vmul.f32 %v132, 1.442695
    %v370 = vpow.pop %v369
    %v371 = vmul.f32 %v133, 1.442695
    %v372 = vpow.pop %v371
    %v373 = vmul.f32 %v134, 1.442695
    %v374 = vpow.pop %v373
    %v375 = vmul.f32 %v135, 1.442695
    %v376 = vpow.pop %v375
    %v377 = vmul.f32 %v136, 1.442695
    %v378 = vpow.pop %v377
    %v379 = vmul.f32 %v137, 1.442695
    %v380 = vpow.pop %v379
    %v381 = vmul.f32 %v138, 1.442695
    %v382 = vpow.pop %v381
    %v383 = vmul.f32 %v139, 1.442695
    %v384 = vpow.pop %v383
    %v385 = vmul.f32 %v140, 1.442695
    %v386 = vpow.pop %v385
    %v387 = vmul.f32 %v141, 1.442695
    %v388 = vpow.pop %v387
    %v389 = vmul.f32 %v142, 1.442695
    %v390 = vpow.pop %v389
    %v391 = vmul.f32 %v143, 1.442695
    %v392 = vpow.pop %v391
    %v393 = vmul.f32 %v144, 1.442695
    %v394 = vpow.pop %v393
    %v395 = vmul.f32 %v145, 1.442695
    %v396 = vpow.pop %v395
    %v397 = vmul.f32 %v146, 1.442695
    %v398 = vpow.pop %v397
    %v399 = vmul.f32 %v147, 1.442695
    %v400 = vpow.pop %v399
    %v401 = vmul.f32 %v148, 1.442695
    %v402 = vpow.pop %v401
    %v403 = vmul.f32 %v149, 1.442695
    %v404 = vpow.pop %v403
    %v405 = vmul.f32 %v150, 1.442695
    %v406 = vpow.pop %v405
    %407 = vst [vmem:[#allocation5] sm:$0xff] %v152
    %408 = vst [vmem:[#allocation5 + $0x8] sm:$0xff] %v154
    %409 = vst [vmem:[#allocation5 + $0x10] sm:$0xff] %v156
    %410 = vst [vmem:[#allocation5 + $0x18] sm:$0xff] %v158
    %411 = vst [vmem:[#allocation5 + $0x20] sm:$0xff] %v160
    %412 = vst [vmem:[#allocation5 + $0x28] sm:$0xff] %v162
    %413 = vst [vmem:[#allocation5 + $0x30] sm:$0xff] %v164
    %414 = vst [vmem:[#allocation5 + $0x38] sm:$0xff] %v166
    %415 = vst [vmem:[#allocation5 + $0x40] sm:$0xff] %v168
    %416 = vst [vmem:[#allocation5 + $0x48] sm:$0xff] %v170
    %417 = vst [vmem:[#allocation5 + $0x50] sm:$0xff] %v172
    %418 = vst [vmem:[#allocation5 + $0x58] sm:$0xff] %v174
    %419 = vst [vmem:[#allocation5 + $0x60] sm:$0xff] %v176
    %420 = vst [vmem:[#allocation5 + $0x68] sm:$0xff] %v178
    %421 = vst [vmem:[#allocation5 + $0x70] sm:$0xff] %v180
    %422 = vst [vmem:[#allocation5 + $0x78] sm:$0xff] %v182
    %423 = vst [vmem:[#allocation5 + $0x80] sm:$0xff] %v184
    %424 = vst [vmem:[#allocation5 + $0x88] sm:$0xff] %v186
    %425 = vst [vmem:[#allocation5 + $0x90] sm:$0xff] %v188
    %426 = vst [vmem:[#allocation5 + $0x98] sm:$0xff] %v190
    %427 = vst [vmem:[#allocation5 + $0xa0] sm:$0xff] %v192
    %428 = vst [vmem:[#allocation5 + $0xa8] sm:$0xff] %v194
    %429 = vst [vmem:[#allocation5 + $0xb0] sm:$0xff] %v196
    %430 = vst [vmem:[#allocation5 + $0xb8] sm:$0xff] %v198
    %431 = vst [vmem:[#allocation5 + $0xc0] sm:$0xff] %v200
    %432 = vst [vmem:[#allocation5 + $0xc8] sm:$0xff] %v202
    %433 = vst [vmem:[#allocation5 + $0xd0] sm:$0xff] %v204
    %434 = vst [vmem:[#allocation5 + $0xd8] sm:$0xff] %v206
    %435 = vst [vmem:[#allocation5 + $0xe0] sm:$0xff] %v208
    %436 = vst [vmem:[#allocation5 + $0xe8] sm:$0xff] %v210
    %437 = vst [vmem:[#allocation5 + $0xf0] sm:$0xff] %v212
    %438 = vst [vmem:[#allocation5 + $0xf8] sm:$0xff] %v214
    %439 = vst [vmem:[#allocation5 + $0x100] sm:$0xff] %v216
    %440 = vst [vmem:[#allocation5 + $0x108] sm:$0xff] %v218
    %441 = vst [vmem:[#allocation5 + $0x110] sm:$0xff] %v220
    %442 = vst [vmem:[#allocation5 + $0x118] sm:$0xff] %v222
    %443 = vst [vmem:[#allocation5 + $0x120] sm:$0xff] %v224
    %444 = vst [vmem:[#allocation5 + $0x128] sm:$0xff] %v226
    %445 = vst [vmem:[#allocation5 + $0x130] sm:$0xff] %v228
    %446 = vst [vmem:[#allocation5 + $0x138] sm:$0xff] %v230
    %447 = vst [vmem:[#allocation5 + $0x140] sm:$0xff] %v232
    %448 = vst [vmem:[#allocation5 + $0x148] sm:$0xff] %v234
    %449 = vst [vmem:[#allocation5 + $0x150] sm:$0xff] %v236
    %450 = vst [vmem:[#allocation5 + $0x158] sm:$0xff] %v238
    %451 = vst [vmem:[#allocation5 + $0x160] sm:$0xff] %v240
    %452 = vst [vmem:[#allocation5 + $0x168] sm:$0xff] %v242
    %453 = vst [vmem:[#allocation5 + $0x170] sm:$0xff] %v244
    %454 = vst [vmem:[#allocation5 + $0x178] sm:$0xff] %v246
    %455 = vst [vmem:[#allocation5 + $0x180] sm:$0xff] %v248
    %456 = vst [vmem:[#allocation5 + $0x188] sm:$0xff] %v250
    %457 = vst [vmem:[#allocation5 + $0x190] sm:$0xff] %v252
    %458 = vst [vmem:[#allocation5 + $0x198] sm:$0xff] %v254
    %459 = vst [vmem:[#allocation5 + $0x1a0] sm:$0xff] %v256
    %460 = vst [vmem:[#allocation5 + $0x1a8] sm:$0xff] %v258
    %461 = vst [vmem:[#allocation5 + $0x1b0] sm:$0xff] %v260
    %462 = vst [vmem:[#allocation5 + $0x1b8] sm:$0xff] %v262
    %463 = vst [vmem:[#allocation5 + $0x1c0] sm:$0xff] %v264
    %464 = vst [vmem:[#allocation5 + $0x1c8] sm:$0xff] %v266
    %465 = vst [vmem:[#allocation5 + $0x1d0] sm:$0xff] %v268
    %466 = vst [vmem:[#allocation5 + $0x1d8] sm:$0xff] %v270
    %467 = vst [vmem:[#allocation5 + $0x1e0] sm:$0xff] %v272
    %468 = vst [vmem:[#allocation5 + $0x1e8] sm:$0xff] %v274
    %469 = vst [vmem:[#allocation5 + $0x1f0] sm:$0xff] %v276
    %470 = vst [vmem:[#allocation5 + $0x1f8] sm:$0xff] %v278
    %471 = vst [vmem:[#allocation5 + $0x200] sm:$0xff] %v280
    %472 = vst [vmem:[#allocation5 + $0x208] sm:$0xff] %v282
    %473 = vst [vmem:[#allocation5 + $0x210] sm:$0xff] %v284
    %474 = vst [vmem:[#allocation5 + $0x218] sm:$0xff] %v286
    %475 = vst [vmem:[#allocation5 + $0x220] sm:$0xff] %v288
    %476 = vst [vmem:[#allocation5 + $0x228] sm:$0xff] %v290
    %477 = vst [vmem:[#allocation5 + $0x230] sm:$0xff] %v292
    %478 = vst [vmem:[#allocation5 + $0x238] sm:$0xff] %v294
    %479 = vst [vmem:[#allocation5 + $0x240] sm:$0xff] %v296
    %480 = vst [vmem:[#allocation5 + $0x248] sm:$0xff] %v298
    %481 = vst [vmem:[#allocation5 + $0x250] sm:$0xff] %v300
    %482 = vst [vmem:[#allocation5 + $0x258] sm:$0xff] %v302
    %483 = vst [vmem:[#allocation5 + $0x260] sm:$0xff] %v304
    %484 = vst [vmem:[#allocation5 + $0x268] sm:$0xff] %v306
    %485 = vst [vmem:[#allocation5 + $0x270] sm:$0xff] %v308
    %486 = vst [vmem:[#allocation5 + $0x278] sm:$0xff] %v310
    %487 = vst [vmem:[#allocation5 + $0x280] sm:$0xff] %v312
    %488 = vst [vmem:[#allocation5 + $0x288] sm:$0xff] %v314
    %489 = vst [vmem:[#allocation5 + $0x290] sm:$0xff] %v316
    %490 = vst [vmem:[#allocation5 + $0x298] sm:$0xff] %v318
    %491 = vst [vmem:[#allocation5 + $0x2a0] sm:$0xff] %v320
    %492 = vst [vmem:[#allocation5 + $0x2a8] sm:$0xff] %v322
    %493 = vst [vmem:[#allocation5 + $0x2b0] sm:$0xff] %v324
    %494 = vst [vmem:[#allocation5 + $0x2b8] sm:$0xff] %v326
    %495 = vst [vmem:[#allocation5 + $0x2c0] sm:$0xff] %v328
    %496 = vst [vmem:[#allocation5 + $0x2c8] sm:$0xff] %v330
    %497 = vst [vmem:[#allocation5 + $0x2d0] sm:$0xff] %v332
    %498 = vst [vmem:[#allocation5 + $0x2d8] sm:$0xff] %v334
    %499 = vst [vmem:[#allocation5 + $0x2e0] sm:$0xff] %v336
    %500 = vst [vmem:[#allocation5 + $0x2e8] sm:$0xff] %v338
    %501 = vst [vmem:[#allocation5 + $0x2f0] sm:$0xff] %v340
    %502 = vst [vmem:[#allocation5 + $0x2f8] sm:$0xff] %v342
    %503 = vst [vmem:[#allocation5 + $0x300] sm:$0xff] %v344
    %504 = vst [vmem:[#allocation5 + $0x308] sm:$0xff] %v346
    %505 = vst [vmem:[#allocation5 + $0x310] sm:$0xff] %v348
    %506 = vst [vmem:[#allocation5 + $0x318] sm:$0xff] %v350
    %507 = vst [vmem:[#allocation5 + $0x320] sm:$0xff] %v352
    %508 = vst [vmem:[#allocation5 + $0x328] sm:$0xff] %v354
    %509 = vst [vmem:[#allocation5 + $0x330] sm:$0xff] %v356
    %510 = vst [vmem:[#allocation5 + $0x338] sm:$0xff] %v358
    %511 = vst [vmem:[#allocation5 + $0x340] sm:$0xff] %v360
    %512 = vst [vmem:[#allocation5 + $0x348] sm:$0xff] %v362
    %513 = vst [vmem:[#allocation5 + $0x350] sm:$0xff] %v364
    %514 = vst [vmem:[#allocation5 + $0x358] sm:$0xff] %v366
    %515 = vst [vmem:[#allocation5 + $0x360] sm:$0xff] %v368
    %516 = vst [vmem:[#allocation5 + $0x368] sm:$0xff] %v370
    %517 = vst [vmem:[#allocation5 + $0x370] sm:$0xff] %v372
    %518 = vst [vmem:[#allocation5 + $0x378] sm:$0xff] %v374
    %519 = vst [vmem:[#allocation5 + $0x380] sm:$0xff] %v376
    %520 = vst [vmem:[#allocation5 + $0x388] sm:$0xff] %v378
    %521 = vst [vmem:[#allocation5 + $0x390] sm:$0xff] %v380
    %522 = vst [vmem:[#allocation5 + $0x398] sm:$0xff] %v382
    %523 = vst [vmem:[#allocation5 + $0x3a0] sm:$0xff] %v384
    %524 = vst [vmem:[#allocation5 + $0x3a8] sm:$0xff] %v386
    %525 = vst [vmem:[#allocation5 + $0x3b0] sm:$0xff] %v388
    %526 = vst [vmem:[#allocation5 + $0x3b8] sm:$0xff] %v390
    %527 = vst [vmem:[#allocation5 + $0x3c0] sm:$0xff] %v392
    %528 = vst [vmem:[#allocation5 + $0x3c8] sm:$0xff] %v394
    %529 = vst [vmem:[#allocation5 + $0x3d0] sm:$0xff] %v396
    %530 = vst [vmem:[#allocation5 + $0x3d8] sm:$0xff] %v398
    %531 = vst [vmem:[#allocation5 + $0x3e0] sm:$0xff] %v400
    %532 = vst [vmem:[#allocation5 + $0x3e8] sm:$0xff] %v402
    %533 = vst [vmem:[#allocation5 + $0x3f0] sm:$0xff] %v404
    %534 = vst [vmem:[#allocation5 + $0x3f8] sm:$0xff] %v406
    // Predicated region
    $region10: #{tpu_custom_call.1} parent=1 // pred_check
      _
    $region11: #{tpu_custom_call.1} parent=1 // pred_check_branch
      %536 = sbr.rel (0) target = $region13
    $region12: #{tpu_custom_call.1} parent=1 // pred_region
      %s538 = ssub.s32 16384, 16384
      %539 = vsyncadd [#allocation4], %s538
      %s540 = sshll.u32 [#allocation5], 4
      %s541 = int_to_ptr.vmem [resolvable:$true] %s540
      %546 = dma.vmem_to_hbm [thread:$0]  %s541, 16384, %s1, [#allocation4], 2048, 2048, 128
    $region13: #{tpu_custom_call.1} parent=1 // pred_fallthru
      _
    // Predicated region
    $region14: #{tpu_custom_call.1} parent=1 // pred_check
      _
    $region15: #{tpu_custom_call.1} parent=1 // pred_check_branch
      %548 = sbr.rel (0) target = $region17
    $region16: #{tpu_custom_call.1} parent=1 // pred_region
      %549 = dma.done [#allocation4], 16384
    $region17: #{tpu_custom_call.1} parent=1 // pred_fallthru
      _
    %550 = vsyncpa [#allocation3], 1
    %551 = vsyncpa [#allocation4], 1

</llo_original>
